<compile_context>
chip_gen: v5e
topology: v5e:2x2
jax: 0.10.0
libtpu: 0.0.40
codegen_flags: <defaults>
</compile_context>

<pallas_src>
import functools

import jax
import jax.numpy as jnp
from jax.experimental import pallas as pl
from jax.experimental.pallas import tpu as pltpu


def _round_up(x, m):
    return ((x + m - 1) // m) * m


def _contrastive_kernel(a_is_ref, a_is_rev_ref, a_em_ref, out_ref, *,
                        margin, batch_size, tile_b, need_mask):
    # (TB, D) blocks; upcast to f32 in-register (free VALU slot on v6e/v7x).
    a_em = a_em_ref[...].astype(jnp.float32)
    diff = a_is_ref[...].astype(jnp.float32) - a_is_rev_ref[...].astype(jnp.float32)

    # Fused form: diag_is - diag_em = sum_d a_em * (a_is - a_is_rev).
    delta = jnp.sum(a_em * diff, axis=-1, keepdims=True)          # (TB, 1)
    cost = jnp.maximum(margin + delta, 0.0)                       # (TB, 1)

    if need_mask:
        row = (pl.program_id(0) * tile_b
               + jax.lax.broadcasted_iota(jnp.int32, (tile_b, 1), 0))
        cost = jnp.where(row < batch_size, cost, 0.0)

    # Per-block partial sum -> scalar in SMEM (no masked vst on the VMEM path).
    out_ref[0, 0] = jnp.sum(cost)


def contrastive_loss_aaai_att(A_is, A_is_rev, A_em, tr_m, embed_dim,
                              margin=0.0, tile_b=None):
    """JAX/Pallas equivalent of ContrastiveLoss_aaai_att.forward."""
    batch = tr_m.shape[0]

    # The .view(batch, 1, embed_dim) in PyTorch -> flatten to (B, D).
    # No dtype cast here: pass inputs through as-is, upcast inside the kernel.
    A_em = jnp.reshape(A_em, (batch, embed_dim))
    A_is = jnp.reshape(A_is, (batch, embed_dim))
    A_is_rev = jnp.reshape(A_is_rev, (batch, embed_dim))

    if tile_b is None:
        # Keep 3 inputs x 2 pipeline buffers x TB x D x 4B under ~12 MiB.
        budget_rows = (12 * 1024 * 1024) // (3 * 2 * 4 * embed_dim)
        tile_b = max(8, min(2048, (budget_rows // 8) * 8))
    tile_b = min(tile_b, _round_up(batch, 8))
    tile_b = max(8, _round_up(tile_b, 8))

    b_pad = _round_up(batch, tile_b)
    num_blocks = b_pad // tile_b
    need_mask = b_pad != batch

    if need_mask:
        pad = ((0, b_pad - batch), (0, 0))
        A_em = jnp.pad(A_em, pad)
        A_is = jnp.pad(A_is, pad)
        A_is_rev = jnp.pad(A_is_rev, pad)

    kernel = functools.partial(
        _contrastive_kernel,
        margin=float(margin),
        batch_size=batch,
        tile_b=tile_b,
        need_mask=need_mask,
    )

    in_spec = pl.BlockSpec((tile_b, embed_dim), lambda i: (i, 0))

    partials = pl.pallas_call(
        kernel,
        out_shape=jax.ShapeDtypeStruct((num_blocks, 1), jnp.float32),
        grid=(num_blocks,),
        in_specs=[in_spec, in_spec, in_spec],
        out_specs=pl.BlockSpec((1, 1), lambda i: (i, 0),
                               memory_space=pltpu.MemorySpace.SMEM),
        compiler_params=pltpu.CompilerParams(
            dimension_semantics=("parallel",)),
    )(A_is, A_is_rev, A_em)

    # PyTorch returns cost_s.sum(0), shape (1,).  Tiny final reduce in JAX so
    # the grid axis stays embarrassingly parallel (megacore-friendly on v7x).
    return jnp.sum(partials).reshape(1)


def _reference(A_is, A_is_rev, A_em, margin=0.0):
    A_is = A_is.astype(jnp.float32)
    A_is_rev = A_is_rev.astype(jnp.float32)
    A_em = A_em.astype(jnp.float32)
    diag_is = jnp.sum(A_em * A_is, axis=-1)
    diag_em = jnp.sum(A_em * A_is_rev, axis=-1)
    return jnp.sum(jnp.maximum(margin + diag_is - diag_em, 0.0))[None]


if __name__ == "__main__":
    key = jax.random.PRNGKey(0)

    # --- Test 1: small deterministic example (batch=8, embed_dim=32, f32). ---
    batch, embed_dim, margin = 8, 32, 0.0
    k1, k2, k3, k4 = jax.random.split(key, 4)
    A_is = jax.random.normal(k1, (batch, embed_dim), dtype=jnp.float32)
    A_is_rev = jax.random.normal(k2, (batch, embed_dim), dtype=jnp.float32)
    A_em = jax.random.normal(k3, (batch, embed_dim), dtype=jnp.float32)
    tr_m = jax.random.normal(k4, (batch, embed_dim), dtype=jnp.float32)

    result = contrastive_loss_aaai_att(A_is, A_is_rev, A_em, tr_m,
                                       embed_dim=embed_dim, margin=margin)
    result = jax.block_until_ready(result)
    ref = _reference(A_is, A_is_rev, A_em, margin)
    assert result.shape == (1,)
    assert jnp.allclose(result, ref, atol=1e-4, rtol=1e-5), (result, ref)

    # --- Test 2: non-multiple batch + positive margin + bf16 pass-through,
    #             forced small tile so the grid / padding / masking path runs. ---
    batch2, embed_dim2, margin2 = 20, 128, 0.25
    k5, k6, k7, k8 = jax.random.split(jax.random.PRNGKey(1), 4)
    B_is = jax.random.normal(k5, (batch2, embed_dim2), dtype=jnp.bfloat16)
    B_is_rev = jax.random.normal(k6, (batch2, embed_dim2), dtype=jnp.bfloat16)
    B_em = jax.random.normal(k7, (batch2, embed_dim2), dtype=jnp.bfloat16)
    tr_m2 = jax.random.normal(k8, (batch2, embed_dim2), dtype=jnp.float32)

    result2 = contrastive_loss_aaai_att(B_is, B_is_rev, B_em, tr_m2,
                                        embed_dim=embed_dim2, margin=margin2,
                                        tile_b=8)   # 3 grid blocks, last padded
    result2 = jax.block_until_ready(result2)
    ref2 = _reference(B_is, B_is_rev, B_em, margin2)
    assert result2.shape == (1,)
    assert jnp.allclose(result2, ref2, atol=1e-2, rtol=1e-3), (result2, ref2)

    print("KERNEL_OK")
</pallas_src>

<mosaic_0001>
module attributes {stable_mosaic.version = 11 : i64} {
  func.func @_contrastive_kernel(%arg0: i32, %arg1: memref<8x32xf32, #tpu.memory_space<vmem>>, %arg2: memref<8x32xf32, #tpu.memory_space<vmem>>, %arg3: memref<8x32xf32, #tpu.memory_space<vmem>>, %arg4: memref<1x1xf32, #tpu.memory_space<smem>>) attributes {dimension_semantics = [#tpu.dimension_semantics<parallel>], iteration_bounds = array<i64: 1>, scalar_prefetch = 0 : i64, scratch_operands = 0 : i64, tpu.core_type = #tpu.core_type<tc>, window_params = [{transform_indices = @transform_0, window_bounds = array<i64: 8, 32>}, {transform_indices = @transform_1, window_bounds = array<i64: 8, 32>}, {transform_indices = @transform_2, window_bounds = array<i64: 8, 32>}, {transform_indices = @transform_3, window_bounds = array<i64: 1, 1>}]} {
    %c0 = arith.constant 0 : index
    %c0_0 = arith.constant 0 : index
    %0 = vector.load %arg3[%c0, %c0_0] : memref<8x32xf32, #tpu.memory_space<vmem>>, vector<8x32xf32>
    %c0_1 = arith.constant 0 : index
    %c0_2 = arith.constant 0 : index
    %1 = vector.load %arg1[%c0_1, %c0_2] : memref<8x32xf32, #tpu.memory_space<vmem>>, vector<8x32xf32>
    %c0_3 = arith.constant 0 : index
    %c0_4 = arith.constant 0 : index
    %2 = vector.load %arg2[%c0_3, %c0_4] : memref<8x32xf32, #tpu.memory_space<vmem>>, vector<8x32xf32>
    %3 = arith.subf %1, %2 : vector<8x32xf32>
    %4 = arith.mulf %0, %3 : vector<8x32xf32>
    %cst = arith.constant dense<0.000000e+00> : vector<8xf32>
    %5 = vector.multi_reduction <add>, %4, %cst [1] : vector<8x32xf32> to vector<8xf32>
    %6 = vector.shape_cast %5 : vector<8xf32> to vector<8x1xf32>
    %cst_5 = arith.constant 0.000000e+00 : f32
    %7 = vector.broadcast %cst_5 : f32 to vector<8x1xf32>
    %8 = arith.addf %7, %6 : vector<8x1xf32>
    %cst_6 = arith.constant 0.000000e+00 : f32
    %9 = vector.broadcast %cst_6 : f32 to vector<8x1xf32>
    %10 = arith.maximumf %8, %9 : vector<8x1xf32>
    %11 = vector.shape_cast %10 : vector<8x1xf32> to vector<1x8x1xf32>
    %cst_7 = arith.constant dense<0.000000e+00> : vector<1xf32>
    %12 = vector.multi_reduction <add>, %11, %cst_7 [1, 2] : vector<1x8x1xf32> to vector<1xf32>
    %13 = vector.shape_cast %12 : vector<1xf32> to vector<1x1x1xf32>
    %14 = vector.extract %13[0, 0, 0] : f32 from vector<1x1x1xf32>
    %c0_8 = arith.constant 0 : index
    %c0_9 = arith.constant 0 : index
    %15 = memref.load %arg4[%c0_8, %c0_9] : memref<1x1xf32, #tpu.memory_space<smem>>
    memref.store %14, %arg4[%c0_8, %c0_9] : memref<1x1xf32, #tpu.memory_space<smem>>
    return
  }
  func.func @transform_0(%arg0: i32) -> (i32, i32) {
    %c0_i32 = arith.constant 0 : i32
    %c0_i32_0 = arith.constant 0 : i32
    return %arg0, %c0_i32 : i32, i32
  }
  func.func @transform_1(%arg0: i32) -> (i32, i32) {
    %c0_i32 = arith.constant 0 : i32
    %c0_i32_0 = arith.constant 0 : i32
    return %arg0, %c0_i32 : i32, i32
  }
  func.func @transform_2(%arg0: i32) -> (i32, i32) {
    %c0_i32 = arith.constant 0 : i32
    %c0_i32_0 = arith.constant 0 : i32
    return %arg0, %c0_i32 : i32, i32
  }
  func.func @transform_3(%arg0: i32) -> (i32, i32) {
    %c0_i32 = arith.constant 0 : i32
    %c0_i32_0 = arith.constant 0 : i32
    return %arg0, %c0_i32 : i32, i32
  }
}

</mosaic_0001>

<llo_original>
// kernel: tpu_custom_call.1
$region0: #{tpu_custom_call.1}
  #allocation0 [shape = 'u32[]', space=smem, size = 0x4, offset = 0x4, fixed_abs, tag = 'smem constant byte address 0x4 - core index']
  #allocation1 [shape = 'u32[72,128]{1,0:T(1,128)}', space=vmem, size = 0x9000, scoped, tag = 'internal scratch']
  %s0 = inlined_call_operand.hbm [shape: f32[8,32], index: 0, kind: input, shape index: {}]
  %s1 = inlined_call_operand.hbm [shape: f32[8,32], index: 1, kind: input, shape index: {}]
  %s2 = inlined_call_operand.hbm [shape: f32[8,32], index: 2, kind: input, shape index: {}]
  %s3 = inlined_call_operand.hbm [shape: f32[1,1], index: 3, kind: output, shape index: {}]
  %s4 = sld [smem:[#allocation0]]
  $region34: #{tpu_custom_call.1} parent=0
    _
  %s6 = ssub.s32 1, %s4
  %s7 = scalar_select 0, %s6, %s4
  $region1: #{tpu_custom_call.1} parent=0
    #allocation2 [shape = 'u8[4096]{0}', space=vmem, size = 0x1000, scoped, tag = 'input window, operand 0, single buffered']
    #allocation3 [shape = 's32[1]{0}', space=sflag, size = 0x4, scoped, tag = 'scoped memory for tpu_custom_call.1']
    #allocation4 [shape = 's32[1]{0}', space=sflag, size = 0x4, scoped, tag = 'scoped memory for tpu_custom_call.1']
    #allocation5 [shape = 'u8[4096]{0}', space=vmem, size = 0x1000, scoped, tag = 'input window, operand 1, single buffered']
    #allocation6 [shape = 's32[1]{0}', space=sflag, size = 0x4, scoped, tag = 'scoped memory for tpu_custom_call.1']
    #allocation7 [shape = 'u8[4096]{0}', space=vmem, size = 0x1000, scoped, tag = 'input window, operand 2, single buffered']
    #allocation8 [shape = 'u8[512]{0}', space=smem, size = 0x200, scoped, tag = 'output window, operand 0, single buffered']
    %8 = vsyncpa [#allocation3], 0
    %9 = vsyncpa [#allocation6], 0
    %10 = vsyncpa [#allocation4], 0
    // Predicated region
    $region2: #{tpu_custom_call.1} parent=1 // pred_check
      _
    $region3: #{tpu_custom_call.1} parent=1 // pred_check_branch
      %12 = sbr.rel (0) target = $region5
    $region4: #{tpu_custom_call.1} parent=1 // pred_region
      %14 = vsyncadd [#allocation3], 0
      %s16 = sshll.u32 %s0, 4
      %s17 = int_to_ptr.hbm [resolvable:$true] %s16
      %s18 = sshll.u32 [#allocation2], 4
      %s19 = int_to_ptr.vmem [resolvable:$true] %s18
      %21 = dma.hbm_to_vmem [thread:$0]  %s17, 128, %s19, [#allocation3]
    $region5: #{tpu_custom_call.1} parent=1 // pred_fallthru
      _
    // Predicated region
    $region6: #{tpu_custom_call.1} parent=1 // pred_check
      _
    $region7: #{tpu_custom_call.1} parent=1 // pred_check_branch
      %23 = sbr.rel (0) target = $region9
    $region8: #{tpu_custom_call.1} parent=1 // pred_region
      %25 = vsyncadd [#allocation6], 0
      %s27 = sshll.u32 %s1, 4
      %s28 = int_to_ptr.hbm [resolvable:$true] %s27
      %s29 = sshll.u32 [#allocation5], 4
      %s30 = int_to_ptr.vmem [resolvable:$true] %s29
      %32 = dma.hbm_to_vmem [thread:$0]  %s28, 128, %s30, [#allocation6]
    $region9: #{tpu_custom_call.1} parent=1 // pred_fallthru
      _
    // Predicated region
    $region10: #{tpu_custom_call.1} parent=1 // pred_check
      _
    $region11: #{tpu_custom_call.1} parent=1 // pred_check_branch
      %34 = sbr.rel (0) target = $region13
    $region12: #{tpu_custom_call.1} parent=1 // pred_region
      %36 = vsyncadd [#allocation6], 0
      %s38 = sshll.u32 %s2, 4
      %s39 = int_to_ptr.hbm [resolvable:$true] %s38
      %s40 = sshll.u32 [#allocation7], 4
      %s41 = int_to_ptr.vmem [resolvable:$true] %s40
      %43 = dma.hbm_to_vmem [thread:$0]  %s39, 128, %s41, [#allocation6]
    $region13: #{tpu_custom_call.1} parent=1 // pred_fallthru
      _
    // Predicated region
    $region14: #{tpu_custom_call.1} parent=1 // pred_check
      _
    $region15: #{tpu_custom_call.1} parent=1 // pred_check_branch
      %45 = sbr.rel (0) target = $region17
    $region16: #{tpu_custom_call.1} parent=1 // pred_region
      %47 = dma.done [#allocation3], 128
    $region17: #{tpu_custom_call.1} parent=1 // pred_fallthru
      _
    // Predicated region
    $region18: #{tpu_custom_call.1} parent=1 // pred_check
      _
    $region19: #{tpu_custom_call.1} parent=1 // pred_check_branch
      %49 = sbr.rel (0) target = $region21
    $region20: #{tpu_custom_call.1} parent=1 // pred_region
      %51 = dma.done [#allocation6], 128
    $region21: #{tpu_custom_call.1} parent=1 // pred_fallthru
      _
    // Predicated region
    $region22: #{tpu_custom_call.1} parent=1 // pred_check
      _
    $region23: #{tpu_custom_call.1} parent=1 // pred_check_branch
      %53 = sbr.rel (0) target = $region25
    $region24: #{tpu_custom_call.1} parent=1 // pred_region
      %55 = dma.done [#allocation6], 128
    $region25: #{tpu_custom_call.1} parent=1 // pred_fallthru
      _
    %v56 = vld [vmem:[#allocation7] sm:$0xff]
    %v57 = vld [vmem:[#allocation2] sm:$0xff]
    %v58 = vld [vmem:[#allocation5] sm:$0xff]
    %v59 = vsub.f32 %v57, %v58
    %v60 = vmul.f32 %v56, %v59
    %vm61 = vcmask 261120
    %v62 = vsel %vm61, %v60, 0.0
    %63 = vadd.xlane.f32.xlu0 %v62
    %v64 = vpop.xlane.xlu0 %63
    %v65 = vadd.f32 %v64, 0.0
    %v66 = vmax.f32 %v65, 0.0
    %vm67 = vcmask 7168
    %v68 = vsel %vm67, %v66, 0.0
    %69 = vadd.xlane.f32.xlu0 %v68
    %v70 = vpop.xlane.xlu0 %69
    %v71 = vrot.slane %v70, 4
    %v72 = vadd.f32 %v70, %v71
    %v73 = vrot.slane %v72, 2
    %v74 = vadd.f32 %v72, %v73
    %v75 = vrot.slane %v74, 1
    %v76 = vadd.f32 %v74, %v75
    %s77 = vtos %v76
    %s78 = scalar_lea.smem [#allocation8], 0
    %79 = sst [smem:[%s78]] %s77
    // Predicated region
    $region26: #{tpu_custom_call.1} parent=1 // pred_check
      _
    $region27: #{tpu_custom_call.1} parent=1 // pred_check_branch
      %81 = sbr.rel (0) target = $region29
    $region28: #{tpu_custom_call.1} parent=1 // pred_region
      %83 = vsyncadd [#allocation4], 0
      %s85 = sshll.u32 %s3, 4
      %s86 = int_to_ptr.hbm [resolvable:$true] %s85
      %88 = dma.smem_to_hbm [#allocation8], 16, %s86, [#allocation4]
    $region29: #{tpu_custom_call.1} parent=1 // pred_fallthru
      _
    // Predicated region
    $region30: #{tpu_custom_call.1} parent=1 // pred_check
      _
    $region31: #{tpu_custom_call.1} parent=1 // pred_check_branch
      %90 = sbr.rel (0) target = $region33
    $region32: #{tpu_custom_call.1} parent=1 // pred_region
      %92 = dma.done [#allocation4], 16
    $region33: #{tpu_custom_call.1} parent=1 // pred_fallthru
      _
    %93 = sfence
    %94 = vsyncpa [#allocation3], 1
    %95 = vsyncpa [#allocation6], 1
    %96 = vsyncpa [#allocation4], 1

</llo_original>
